<compile_context>
chip_gen: v5e
topology: v5e:2x2
jax: 0.10.0
libtpu: 0.0.40
codegen_flags: <defaults>
</compile_context>

<pallas_src>
import jax
import jax.numpy as jnp
from jax.experimental import pallas as pl
from jax.experimental.pallas import tpu as pltpu

# ---- problem sizes (small, consistent with the module) ----------------------
L = 2            # agent_qs.size(0)
N = 8            # agent_qs.size(1)
N_AGENTS = 4     # n_agents
STATE_DIM = 32   # state_shape
EMBED_DIM = 32   # args.embed_dim
B = L * N        # flattened batch

AE = N_AGENTS * EMBED_DIM          # 128: width of the hyper_w_1 head
CAT_REAL = AE + 3 * EMBED_DIM      # 224: real columns of the fused linear
CAT_PAD = 256                      # padded to a lane-aligned width


def qmix_kernel(states_ref, aq_exp_ref, wcat_ref, bcat_ref,
                v2w_ref, v2b_ref, out_ref):
    s = states_ref[...].astype(jnp.float32)       # (B, S)
    aqe = aq_exp_ref[...].astype(jnp.float32)     # (B, A*E)

    # One fused MXU matmul for all four state->X hyper linears.
    h = (jnp.dot(s, wcat_ref[...], preferred_element_type=jnp.float32)
         + bcat_ref[...])                          # (B, 256)

    E = EMBED_DIM
    w1 = jnp.abs(h[:, :AE])                        # (B, A*E)   hyper_w_1
    b1 = h[:, AE:AE + E]                           # (B, E)     hyper_b_1
    wf = jnp.abs(h[:, AE + E:AE + 2 * E])          # (B, E)     hyper_w_final
    vh = jnp.maximum(h[:, AE + 2 * E:AE + 3 * E], 0.0)  # (B, E) ReLU(V[0])

    # th.bmm(agent_qs (B,1,A), w1 (B,A,E)): one VPU mul + 4 segment adds.
    p = aqe * w1                                   # (B, A*E)
    hidden = b1
    for a in range(N_AGENTS):
        hidden = hidden + p[:, a * E:(a + 1) * E]

    # ELU (alpha = 1); exp only on the clamped-negative branch (no inf).
    hidden = jnp.where(hidden > 0, hidden,
                       jnp.exp(jnp.minimum(hidden, 0.0)) - 1.0)

    # V head second linear as VPU mul + lane reduce (no N=1 MXU pass).
    v = jnp.sum(vh * v2w_ref[...], axis=-1, keepdims=True) + v2b_ref[...]

    # th.bmm(hidden (B,1,E), w_final (B,E,1)) + v : per-sample dot over E.
    y = jnp.sum(hidden * wf, axis=-1, keepdims=True) + v   # (B, 1)
    out_ref[...] = y.astype(out_ref.dtype)


def qmixer_forward(agent_qs, states, params):
    """agent_qs: (L, N, n_agents), states: (L, N, state_dim) -> (L, N, 1)."""
    l, n, a = agent_qs.shape
    b = l * n
    aq2 = agent_qs.reshape(b, a).astype(jnp.float32)
    st2 = states.reshape(b, STATE_DIM).astype(jnp.float32)

    (w1_w, w1_b, b1_w, b1_b, wf_w, wf_b, v1_w, v1_b, v2_w, v2_b) = params

    # Pre-expand agent_qs to (B, A*E): each agent value repeated E times,
    # matching the agent-major (A, E) layout of the hyper_w_1 output.
    aq_exp = jnp.repeat(aq2, EMBED_DIM, axis=1)            # (B, A*E)

    # Fuse the four state->X linears into one (S, 256) weight + (1, 256) bias.
    wcat = jnp.concatenate([w1_w, b1_w, wf_w, v1_w], axis=1)   # (S, 224)
    bcat = jnp.concatenate([w1_b, b1_b, wf_b, v1_b], axis=1)   # (1, 224)
    wcat = jnp.pad(wcat, ((0, 0), (0, CAT_PAD - CAT_REAL)))    # (S, 256)
    bcat = jnp.pad(bcat, ((0, 0), (0, CAT_PAD - CAT_REAL)))    # (1, 256)

    v2w_row = v2_w.reshape(1, EMBED_DIM)                       # (1, E)

    vmem = pl.BlockSpec(memory_space=pltpu.MemorySpace.VMEM)
    out = pl.pallas_call(
        qmix_kernel,
        out_shape=jax.ShapeDtypeStruct((b, 1), jnp.float32),
        in_specs=[vmem] * 6,
        out_specs=vmem,
    )(st2, aq_exp, wcat, bcat, v2w_row, v2_b)

    return out.reshape(l, n, 1)


def init_params(key):
    """Deterministic synthetic parameters (Linear weights as (in, out))."""
    ks = jax.random.split(key, 10)
    u = lambda k, shape, fan_in: jax.random.uniform(
        k, shape, jnp.float32, -1.0 / jnp.sqrt(fan_in), 1.0 / jnp.sqrt(fan_in))
    S, A, E = STATE_DIM, N_AGENTS, EMBED_DIM
    w1_w = u(ks[0], (S, A * E), S); w1_b = u(ks[1], (1, A * E), S)
    b1_w = u(ks[2], (S, E), S);     b1_b = u(ks[3], (1, E), S)
    wf_w = u(ks[4], (S, E), S);     wf_b = u(ks[5], (1, E), S)
    v1_w = u(ks[6], (S, E), S);     v1_b = u(ks[7], (1, E), S)
    v2_w = u(ks[8], (E, 1), E);     v2_b = u(ks[9], (1, 1), E)
    return (w1_w, w1_b, b1_w, b1_b, wf_w, wf_b, v1_w, v1_b, v2_w, v2_b)


def qmixer_ref(agent_qs, states, params):
    """Pure-JAX reference matching the PyTorch forward."""
    (w1_w, w1_b, b1_w, b1_b, wf_w, wf_b, v1_w, v1_b, v2_w, v2_b) = params
    l, n, a = agent_qs.shape
    st = states.reshape(-1, STATE_DIM)
    aq = agent_qs.reshape(-1, 1, a)
    w1 = jnp.abs(st @ w1_w + w1_b).reshape(-1, a, EMBED_DIM)
    b1 = (st @ b1_w + b1_b).reshape(-1, 1, EMBED_DIM)
    hidden = jax.nn.elu(jnp.einsum("bia,bae->bie", aq, w1) + b1)
    wf = jnp.abs(st @ wf_w + wf_b).reshape(-1, EMBED_DIM, 1)
    v = (jnp.maximum(st @ v1_w + v1_b, 0.0) @ v2_w + v2_b).reshape(-1, 1, 1)
    y = jnp.einsum("bie,bej->bij", hidden, wf) + v
    return y.reshape(l, n, 1)


if __name__ == "__main__":
    key = jax.random.PRNGKey(0)
    k_aq, k_st, k_p = jax.random.split(key, 3)
    agent_qs = jax.random.normal(k_aq, (L, N, N_AGENTS), jnp.float32)
    states = jax.random.normal(k_st, (L, N, STATE_DIM), jnp.float32)
    params = init_params(k_p)

    q_tot = qmixer_forward(agent_qs, states, params)
    q_tot = jax.block_until_ready(q_tot)

    q_ref = qmixer_ref(agent_qs, states, params)
    assert q_tot.shape == (L, N, 1)
    assert jnp.allclose(q_tot, q_ref, atol=1e-4, rtol=1e-4), (
        f"max abs err {jnp.max(jnp.abs(q_tot - q_ref))}")
    print("KERNEL_OK")
</pallas_src>

<mosaic_0001>
module attributes {stable_mosaic.version = 11 : i64} {
  func.func @qmix_kernel(%arg0: memref<16x32xf32, #tpu.memory_space<vmem>>, %arg1: memref<16x128xf32, #tpu.memory_space<vmem>>, %arg2: memref<32x256xf32, #tpu.memory_space<vmem>>, %arg3: memref<1x256xf32, #tpu.memory_space<vmem>>, %arg4: memref<1x32xf32, #tpu.memory_space<vmem>>, %arg5: memref<1x1xf32, #tpu.memory_space<vmem>>, %arg6: memref<16x1xf32, #tpu.memory_space<vmem>>) attributes {dimension_semantics = [], scalar_prefetch = 0 : i64, scratch_operands = 0 : i64, tpu.core_type = #tpu.core_type<tc>} {
    %c0 = arith.constant 0 : index
    %c0_0 = arith.constant 0 : index
    %0 = vector.load %arg0[%c0, %c0_0] : memref<16x32xf32, #tpu.memory_space<vmem>>, vector<16x32xf32>
    %c0_1 = arith.constant 0 : index
    %c0_2 = arith.constant 0 : index
    %1 = vector.load %arg1[%c0_1, %c0_2] : memref<16x128xf32, #tpu.memory_space<vmem>>, vector<16x128xf32>
    %c0_3 = arith.constant 0 : index
    %c0_4 = arith.constant 0 : index
    %2 = vector.load %arg2[%c0_3, %c0_4] : memref<32x256xf32, #tpu.memory_space<vmem>>, vector<32x256xf32>
    %cst = arith.constant dense<0.000000e+00> : vector<16x256xf32>
    %3 = tpu.matmul %0, %2, %cst {dimension_numbers = #tpu.dot_dimension_numbers<[1], [0], [0], [1], [0, 0, 1, 1], [], []>} : vector<16x32xf32>, vector<32x256xf32>, vector<16x256xf32> -> vector<16x256xf32>
    %c0_5 = arith.constant 0 : index
    %c0_6 = arith.constant 0 : index
    %4 = vector.load %arg3[%c0_5, %c0_6] : memref<1x256xf32, #tpu.memory_space<vmem>>, vector<1x256xf32>
    %5 = vector.broadcast %4 : vector<1x256xf32> to vector<16x256xf32>
    %6 = arith.addf %3, %5 : vector<16x256xf32>
    %7 = vector.extract_strided_slice %6 {offsets = [0, 0], sizes = [16, 128], strides = [1, 1]} : vector<16x256xf32> to vector<16x128xf32>
    %8 = math.absf %7 : vector<16x128xf32>
    %9 = vector.extract_strided_slice %6 {offsets = [0, 128], sizes = [16, 32], strides = [1, 1]} : vector<16x256xf32> to vector<16x32xf32>
    %10 = vector.extract_strided_slice %6 {offsets = [0, 160], sizes = [16, 32], strides = [1, 1]} : vector<16x256xf32> to vector<16x32xf32>
    %11 = math.absf %10 : vector<16x32xf32>
    %12 = vector.extract_strided_slice %6 {offsets = [0, 192], sizes = [16, 32], strides = [1, 1]} : vector<16x256xf32> to vector<16x32xf32>
    %cst_7 = arith.constant 0.000000e+00 : f32
    %13 = vector.broadcast %cst_7 : f32 to vector<16x32xf32>
    %14 = arith.maximumf %12, %13 : vector<16x32xf32>
    %15 = arith.mulf %1, %8 : vector<16x128xf32>
    %16 = vector.extract_strided_slice %15 {offsets = [0, 0], sizes = [16, 32], strides = [1, 1]} : vector<16x128xf32> to vector<16x32xf32>
    %17 = arith.addf %9, %16 : vector<16x32xf32>
    %18 = vector.extract_strided_slice %15 {offsets = [0, 32], sizes = [16, 32], strides = [1, 1]} : vector<16x128xf32> to vector<16x32xf32>
    %19 = arith.addf %17, %18 : vector<16x32xf32>
    %20 = vector.extract_strided_slice %15 {offsets = [0, 64], sizes = [16, 32], strides = [1, 1]} : vector<16x128xf32> to vector<16x32xf32>
    %21 = arith.addf %19, %20 : vector<16x32xf32>
    %22 = vector.extract_strided_slice %15 {offsets = [0, 96], sizes = [16, 32], strides = [1, 1]} : vector<16x128xf32> to vector<16x32xf32>
    %23 = arith.addf %21, %22 : vector<16x32xf32>
    %cst_8 = arith.constant 0.000000e+00 : f32
    %24 = vector.broadcast %cst_8 : f32 to vector<16x32xf32>
    %25 = arith.cmpf ogt, %23, %24 : vector<16x32xf32>
    %cst_9 = arith.constant 0.000000e+00 : f32
    %26 = vector.broadcast %cst_9 : f32 to vector<16x32xf32>
    %27 = arith.minimumf %23, %26 : vector<16x32xf32>
    %28 = math.exp %27 : vector<16x32xf32>
    %cst_10 = arith.constant 1.000000e+00 : f32
    %29 = vector.broadcast %cst_10 : f32 to vector<16x32xf32>
    %30 = arith.subf %28, %29 : vector<16x32xf32>
    %31 = arith.select %25, %23, %30 : vector<16x32xi1>, vector<16x32xf32>
    %c0_11 = arith.constant 0 : index
    %c0_12 = arith.constant 0 : index
    %32 = vector.load %arg4[%c0_11, %c0_12] : memref<1x32xf32, #tpu.memory_space<vmem>>, vector<1x32xf32>
    %33 = vector.broadcast %32 : vector<1x32xf32> to vector<16x32xf32>
    %34 = arith.mulf %14, %33 : vector<16x32xf32>
    %cst_13 = arith.constant dense<0.000000e+00> : vector<16xf32>
    %35 = vector.multi_reduction <add>, %34, %cst_13 [1] : vector<16x32xf32> to vector<16xf32>
    %36 = vector.shape_cast %35 : vector<16xf32> to vector<16x1xf32>
    %c0_14 = arith.constant 0 : index
    %c0_15 = arith.constant 0 : index
    %37 = vector.load %arg5[%c0_14, %c0_15] : memref<1x1xf32, #tpu.memory_space<vmem>>, vector<1x1xf32>
    %38 = vector.broadcast %37 : vector<1x1xf32> to vector<16x1xf32>
    %39 = arith.addf %36, %38 : vector<16x1xf32>
    %40 = arith.mulf %31, %11 : vector<16x32xf32>
    %cst_16 = arith.constant dense<0.000000e+00> : vector<16xf32>
    %41 = vector.multi_reduction <add>, %40, %cst_16 [1] : vector<16x32xf32> to vector<16xf32>
    %42 = vector.shape_cast %41 : vector<16xf32> to vector<16x1xf32>
    %43 = arith.addf %42, %39 : vector<16x1xf32>
    %c0_17 = arith.constant 0 : index
    %c0_18 = arith.constant 0 : index
    %44 = vector.load %arg6[%c0_17, %c0_18] : memref<16x1xf32, #tpu.memory_space<vmem>>, vector<16x1xf32>
    tpu.vector_store %arg6[%c0_17, %c0_18], %43 {strides = array<i32>} : memref<16x1xf32, #tpu.memory_space<vmem>>, vector<16x1xf32>,
    return
  }
}

</mosaic_0001>

<llo_original>
// kernel: tpu_custom_call.1
$region0: #{tpu_custom_call.1}
  #allocation0 [shape = 'u32[]', space=smem, size = 0x4, offset = 0x4, fixed_abs, tag = 'smem constant byte address 0x4 - core index']
  #allocation1 [shape = 'u32[72,128]{1,0:T(1,128)}', space=vmem, size = 0x9000, scoped, tag = 'internal scratch']
  #allocation2 [shape = 'f32[1,1]{1,0:T(1,128)S(1)}', space=vmem, size = 0x200, scoped, tag = 'scoped memory for tpu_custom_call.1']
  %s0 = inlined_call_operand.hbm [shape: f32[16,32], index: 0, kind: input, shape index: {}]
  %s1 = inlined_call_operand.hbm [shape: f32[16,128], index: 1, kind: input, shape index: {}]
  %s2 = inlined_call_operand.hbm [shape: f32[32,256], index: 2, kind: input, shape index: {}]
  %s3 = inlined_call_operand.vmem [shape: f32[1,256], index: 3, kind: input, shape index: {}]
  %s4 = inlined_call_operand.vmem [shape: f32[1,32], index: 4, kind: input, shape index: {}]
  %s5 = inlined_call_operand.<no memory space> [shape: f32[1,1], index: 5, kind: input, shape index: {}]
  %s6 = inlined_call_operand.vmem [shape: f32[16,1], index: 6, kind: output, shape index: {}]
  %s7 = sld [smem:[#allocation0]]
  $region46: #{tpu_custom_call.1} parent=0
    _
  %s9 = ssub.s32 1, %s7
  %s10 = scalar_select 0, %s9, %s7
  %v11 = vstv %s5
  %12 = vst [vmem:[#allocation2] sm:$0x1] %v11
  $region1: #{tpu_custom_call.1} parent=0
    #allocation3 [shape = 'u8[8192]{0}', space=vmem, size = 0x2000, scoped, tag = 'input window, operand 0, single buffered']
    #allocation4 [shape = 's32[1]{0}', space=sflag, size = 0x4, scoped, tag = 'scoped memory for tpu_custom_call.1']
    #allocation5 [shape = 'u8[8192]{0}', space=vmem, size = 0x2000, scoped, tag = 'input window, operand 1, single buffered']
    #allocation6 [shape = 's32[1]{0}', space=sflag, size = 0x4, scoped, tag = 'scoped memory for tpu_custom_call.1']
    #allocation7 [shape = 'u8[32768]{0}', space=vmem, size = 0x8000, scoped, tag = 'input window, operand 2, single buffered']
    %13 = vsyncpa [#allocation4], 0
    %14 = vsyncpa [#allocation6], 0
    // Predicated region
    $region2: #{tpu_custom_call.1} parent=1 // pred_check
      _
    $region3: #{tpu_custom_call.1} parent=1 // pred_check_branch
      %16 = sbr.rel (0) target = $region5
    $region4: #{tpu_custom_call.1} parent=1 // pred_region
      %18 = vsyncadd [#allocation4], 0
      %s19 = sshll.u32 %s0, 4
      %s20 = int_to_ptr.hbm [resolvable:$true] %s19
      %s21 = sshll.u32 [#allocation3], 4
      %s22 = int_to_ptr.vmem [resolvable:$true] %s21
      %27 = dma.hbm_to_vmem [thread:$0]  %s20, 256, %s22, [#allocation4], 128, 128, 8
    $region5: #{tpu_custom_call.1} parent=1 // pred_fallthru
      _
    // Predicated region
    $region6: #{tpu_custom_call.1} parent=1 // pred_check
      _
    $region7: #{tpu_custom_call.1} parent=1 // pred_check_branch
      %29 = sbr.rel (0) target = $region9
    $region8: #{tpu_custom_call.1} parent=1 // pred_region
      %31 = vsyncadd [#allocation6], 0
      %s32 = sshll.u32 %s1, 4
      %s33 = int_to_ptr.hbm [resolvable:$true] %s32
      %s34 = sshll.u32 [#allocation5], 4
      %s35 = int_to_ptr.vmem [resolvable:$true] %s34
      %40 = dma.hbm_to_vmem [thread:$0]  %s33, 256, %s35, [#allocation6], 128, 128, 8
    $region9: #{tpu_custom_call.1} parent=1 // pred_fallthru
      _
    // Predicated region
    $region10: #{tpu_custom_call.1} parent=1 // pred_check
      _
    $region11: #{tpu_custom_call.1} parent=1 // pred_check_branch
      %42 = sbr.rel (0) target = $region13
    $region12: #{tpu_custom_call.1} parent=1 // pred_region
      %44 = vsyncadd [#allocation6], 0
      %s45 = sshll.u32 %s2, 4
      %s46 = int_to_ptr.hbm [resolvable:$true] %s45
      %s47 = sshll.u32 [#allocation7], 4
      %s48 = int_to_ptr.vmem [resolvable:$true] %s47
      %53 = dma.hbm_to_vmem [thread:$0]  %s46, 1024, %s48, [#allocation6], 256, 256, 16
    $region13: #{tpu_custom_call.1} parent=1 // pred_fallthru
      _
    // Predicated region
    $region14: #{tpu_custom_call.1} parent=1 // pred_check
      _
    $region15: #{tpu_custom_call.1} parent=1 // pred_check_branch
      %55 = sbr.rel (0) target = $region17
    $region16: #{tpu_custom_call.1} parent=1 // pred_region
      _
    $region17: #{tpu_custom_call.1} parent=1 // pred_fallthru
      _
    // Predicated region
    $region18: #{tpu_custom_call.1} parent=1 // pred_check
      _
    $region19: #{tpu_custom_call.1} parent=1 // pred_check_branch
      %57 = sbr.rel (0) target = $region21
    $region20: #{tpu_custom_call.1} parent=1 // pred_region
      _
    $region21: #{tpu_custom_call.1} parent=1 // pred_fallthru
      _
    // Predicated region
    $region22: #{tpu_custom_call.1} parent=1 // pred_check
      _
    $region23: #{tpu_custom_call.1} parent=1 // pred_check_branch
      %59 = sbr.rel (0) target = $region25
    $region24: #{tpu_custom_call.1} parent=1 // pred_region
      _
    $region25: #{tpu_custom_call.1} parent=1 // pred_fallthru
      _
    // Predicated region
    $region26: #{tpu_custom_call.1} parent=1 // pred_check
      _
    $region27: #{tpu_custom_call.1} parent=1 // pred_check_branch
      %61 = sbr.rel (0) target = $region29
    $region28: #{tpu_custom_call.1} parent=1 // pred_region
      %63 = dma.done [#allocation4], 256
    $region29: #{tpu_custom_call.1} parent=1 // pred_fallthru
      _
    // Predicated region
    $region30: #{tpu_custom_call.1} parent=1 // pred_check
      _
    $region31: #{tpu_custom_call.1} parent=1 // pred_check_branch
      %65 = sbr.rel (0) target = $region33
    $region32: #{tpu_custom_call.1} parent=1 // pred_region
      %67 = dma.done [#allocation6], 256
    $region33: #{tpu_custom_call.1} parent=1 // pred_fallthru
      _
    // Predicated region
    $region34: #{tpu_custom_call.1} parent=1 // pred_check
      _
    $region35: #{tpu_custom_call.1} parent=1 // pred_check_branch
      %69 = sbr.rel (0) target = $region37
    $region36: #{tpu_custom_call.1} parent=1 // pred_region
      %71 = dma.done [#allocation6], 1024
    $region37: #{tpu_custom_call.1} parent=1 // pred_fallthru
      _
    %v72 = vld [vmem:[#allocation3] sm:$0xff]
    %v73 = vld [vmem:[#allocation3 + $0x8] sm:$0xff]
    %v74 = vld [vmem:[#allocation5] sm:$0xff]
    %v75 = vld [vmem:[#allocation5 + $0x8] sm:$0xff]
    %v76 = vld [vmem:[#allocation7] sm:$0xff]
    %v77 = vld [vmem:[#allocation7 + $0x8] sm:$0xff]
    %v78 = vld [vmem:[#allocation7 + $0x10] sm:$0xff]
    %v79 = vld [vmem:[#allocation7 + $0x18] sm:$0xff]
    %v80 = vld [vmem:[#allocation7 + $0x20] sm:$0xff]
    %v81 = vld [vmem:[#allocation7 + $0x28] sm:$0xff]
    %v82 = vld [vmem:[#allocation7 + $0x30] sm:$0xff]
    %v83 = vld [vmem:[#allocation7 + $0x38] sm:$0xff]
    %v84 = vld [vmem:[%s3] sm:$0x3]
    %v86 = vperm.slane %v84, 0
    %v87 = vperm.slane %v84, 1
    %vm90 = vcmask 261120
    %v92 = vsel %vm90, %v72, 0
    %v95 = vsel %vm90, %v73, 0
    %97 = vmatpush.msra.mxu0 0.0
    %98 = vmatpush.msra.mxu0 0.0
    %99 = vmatpush.msra.mxu0 0.0
    %100 = vmatpush.msra.mxu0 0.0
    %101 = vmatpush.msra.mxu0 0.0
    %102 = vmatpush.msra.mxu0 0.0
    %103 = vmatpush.msra.mxu0 0.0
    %104 = vmatpush.msra.mxu0 0.0
    %105 = vmatpush.msra.mxu0 0.0
    %106 = vmatpush.msra.mxu0 0.0
    %107 = vmatpush.msra.mxu0 0.0
    %108 = vmatpush.msra.mxu0 0.0
    %109 = vmatpush.msra.mxu0 %v82
    %110 = vmatpush.msra.mxu0 %v80
    %111 = vmatpush.msra.mxu0 %v78
    %112 = vmatpush.msra.mxu0 %v76
    %113 = vmatmul.f32.gmra.mxu0 %v92
    %v114 = vpop.f32.mrf.mxu0
    %v115 = vadd.f32 %v86, %v114
    %116 = vmatmul.f32.gmra.mxu0 %v95
    %v117 = vpop.f32.mrf.mxu0
    %v118 = vadd.f32 %v86, %v117
    %119 = vdwg.mxu0
    %120 = vmatpush.msra.mxu0 0.0
    %121 = vmatpush.msra.mxu0 0.0
    %122 = vmatpush.msra.mxu0 0.0
    %123 = vmatpush.msra.mxu0 0.0
    %124 = vmatpush.msra.mxu0 0.0
    %125 = vmatpush.msra.mxu0 0.0
    %126 = vmatpush.msra.mxu0 0.0
    %127 = vmatpush.msra.mxu0 0.0
    %128 = vmatpush.msra.mxu0 0.0
    %129 = vmatpush.msra.mxu0 0.0
    %130 = vmatpush.msra.mxu0 0.0
    %131 = vmatpush.msra.mxu0 0.0
    %132 = vmatpush.msra.mxu0 %v83
    %133 = vmatpush.msra.mxu0 %v81
    %134 = vmatpush.msra.mxu0 %v79
    %135 = vmatpush.msra.mxu0 %v77
    %136 = vmatmul.f32.gmra.mxu0 %v92
    %v137 = vpop.f32.mrf.mxu0
    %v138 = vadd.f32 %v87, %v137
    %139 = vmatmul.f32.gmra.mxu0 %v95
    %v140 = vpop.f32.mrf.mxu0
    %v141 = vadd.f32 %v87, %v140
    %142 = vdwg.mxu0
    %v143 = vand.u32 2147483647, %v115
    %v144 = vand.u32 2147483647, %v118
    %v145 = vand.u32 2147483647, %v138
    %v146 = vand.u32 2147483647, %v141
    %v147 = vmax.f32 %v138, 0.0
    %v148 = vmax.f32 %v141, 0.0
    %v149 = vmul.f32 %v74, %v143
    %v150 = vmul.f32 %v75, %v144
    %v151 = vadd.f32 %v138, %v149
    %v152 = vadd.f32 %v141, %v150
    %155 = vrot.lane.b32.xlu0 %v149, 96
    %v156 = vpop.permute.xlu0 %155
    %157 = vrot.lane.b32.xlu0 %v150, 96
    %v158 = vpop.permute.xlu0 %157
    %v161 = vadd.f32 %v151, %v156
    %v162 = vadd.f32 %v152, %v158
    %163 = vrot.lane.b32.xlu0 %v149, 64
    %v164 = vpop.permute.xlu0 %163
    %165 = vrot.lane.b32.xlu0 %v150, 64
    %v166 = vpop.permute.xlu0 %165
    %v169 = vadd.f32 %v161, %v164
    %v170 = vadd.f32 %v162, %v166
    %171 = vrot.lane.b32.xlu0 %v149, 32
    %v172 = vpop.permute.xlu0 %171
    %173 = vrot.lane.b32.xlu0 %v150, 32
    %v174 = vpop.permute.xlu0 %173
    %v177 = vadd.f32 %v169, %v172
    %v178 = vadd.f32 %v170, %v174
    %vm179 = vcmp.gt.f32.partialorder %v177, 0.0
    %vm180 = vcmp.gt.f32.partialorder %v178, 0.0
    %v181 = vmin.f32 %v177, 0.0
    %v182 = vmin.f32 %v178, 0.0
    %v183 = vmul.f32 %v181, 1.442695
    %v184 = vpow.pop %v183
    %v185 = vmul.f32 %v182, 1.442695
    %v186 = vpow.pop %v185
    %v187 = vsub.f32 %v184, 1.0
    %v188 = vsub.f32 %v186, 1.0
    %v189 = vsel %vm179, %v177, %v187
    %v190 = vsel %vm180, %v178, %v188
    %v191 = vld [vmem:[%s4] sm:$0x1]
    %v193 = vperm.slane %v191, 0
    %194 = vrot.lane.b32.xlu0 %v193, 64
    %v195 = vpop.permute.xlu0 %194
    %v197 = vmul.f32 %v147, %v195
    %v198 = vmul.f32 %v148, %v195
    %201 = vrot.lane.b32.xlu0 %v197, 64
    %v202 = vpop.permute.xlu0 %201
    %203 = vrot.lane.b32.xlu0 %v198, 64
    %v204 = vpop.permute.xlu0 %203
    %v207 = vsel %vm90, %v202, 0.0
    %208 = vadd.xlane.f32.xlu0 %v207
    %v209 = vpop.xlane.xlu0 %208
    %v210 = vsel %vm90, %v204, 0.0
    %211 = vadd.xlane.f32.xlu0 %v210
    %v212 = vpop.xlane.xlu0 %211
    %v213 = vld [vmem:[#allocation2] sm:$0x1]
    %v215 = vperm.slane %v213, 0
    %v217 = vadd.f32 %v209, %v215
    %v218 = vadd.f32 %v212, %v215
    %221 = vrot.lane.b32.xlu0 %v145, 96
    %v222 = vpop.permute.xlu0 %221
    %223 = vrot.lane.b32.xlu0 %v146, 96
    %v224 = vpop.permute.xlu0 %223
    %v227 = vmul.f32 %v189, %v222
    %v228 = vmul.f32 %v190, %v224
    %v229 = vsel %vm90, %v227, 0.0
    %230 = vadd.xlane.f32.xlu0 %v229
    %v231 = vpop.xlane.xlu0 %230
    %v232 = vsel %vm90, %v228, 0.0
    %233 = vadd.xlane.f32.xlu0 %v232
    %v234 = vpop.xlane.xlu0 %233
    %v235 = vadd.f32 %v231, %v217
    %v236 = vadd.f32 %v234, %v218
    %vm237 = vcmask 7168
    %238 = vst.msk [vmem:[%s6] sm:$0xff] %vm237, %v235
    %239 = vst.msk [vmem:[%s6 + $0x8] sm:$0xff] %vm237, %v236
    // Predicated region
    $region38: #{tpu_custom_call.1} parent=1 // pred_check
      _
    $region39: #{tpu_custom_call.1} parent=1 // pred_check_branch
      %241 = sbr.rel (0) target = $region41
    $region40: #{tpu_custom_call.1} parent=1 // pred_region
      _
    $region41: #{tpu_custom_call.1} parent=1 // pred_fallthru
      _
    // Predicated region
    $region42: #{tpu_custom_call.1} parent=1 // pred_check
      _
    $region43: #{tpu_custom_call.1} parent=1 // pred_check_branch
      %243 = sbr.rel (0) target = $region45
    $region44: #{tpu_custom_call.1} parent=1 // pred_region
      _
    $region45: #{tpu_custom_call.1} parent=1 // pred_fallthru
      _
    %244 = vsyncpa [#allocation4], 1
    %245 = vsyncpa [#allocation6], 1

</llo_original>
